<compile_context>
chip_gen: v5e
topology: v5e:2x2
jax: 0.10.0
libtpu: 0.0.40
codegen_flags: <defaults>
</compile_context>

<pallas_src>
import functools
import math

import jax
import jax.numpy as jnp
from jax.experimental import pallas as pl
from jax.experimental.pallas import tpu as pltpu

NUM_ACTIONS = 20
LANES = 128
_TR_MAX = 2048  # packed rows per grid step at pe=128 (1 MiB f32 z / noise blocks)


def _renorm_rows(w, max_norm=1.0, eps=1e-7):
    """nn.Embedding(max_norm=1): rows with L2 norm > max_norm scaled to max_norm."""
    norm = jnp.sqrt(jnp.sum(w * w, axis=-1, keepdims=True))
    scale = jnp.where(norm > max_norm, max_norm / (norm + eps), 1.0)
    return w * scale


def _block_diag(table, p):
    """[A, E] -> [p*A, p*E] block-diagonal replication (p logical rows / lane row)."""
    if p == 1:
        return table
    a, e = table.shape
    eye = jnp.eye(p, dtype=table.dtype)
    return jnp.einsum("pq,ae->paqe", eye, table).reshape(p * a, p * e)


def _actions_ae_kernel(idx_ref, table_ref, noise_ref, z_ref, *, p, pe):
    """z for one block of TR packed rows (each packing `p` logical elements).

    idx_ref   : [TR, p]        int32     action ids
    table_ref : [p*20, 2*pe]   bfloat16  [blkdiag(mu) | blkdiag(sigma)]
    noise_ref : [TR, pe]       float32   reparameterization noise
    z_ref     : [TR, pe]       float32   output samples
    """
    cols = p * NUM_ACTIONS
    idx = idx_ref[...]
    tr = idx.shape[0]

    # Packed one-hot: for slot pp, column 20*pp + idx[r, pp] is hot.
    # Built with boolean ORs and a single cast (0/1 are exact in bf16).
    # NOTE: ids outside [0, 20) give an all-zero segment -> mu = sigma = 0
    # (PyTorch would raise instead).
    col_ids = jax.lax.broadcasted_iota(jnp.int32, (tr, cols), 1)
    hot = col_ids == idx[:, 0:1]
    for pp in range(1, p):
        hot = hot | (col_ids == idx[:, pp:pp + 1] + pp * NUM_ACTIONS)
    one_hot = hot.astype(jnp.bfloat16)

    # Single-pass bf16 MXU lookup (renorm / exp already folded into the table),
    # accumulated in f32.
    looked = jnp.dot(one_hot, table_ref[...], preferred_element_type=jnp.float32)
    mu = looked[:, :pe]            # pe is a multiple of 128 -> aligned slices
    sigma = looked[:, pe:]

    # Lane-dense sample write.
    z_ref[...] = mu + sigma * noise_ref[...]


def actions_autoencoder_forward(x_idx, mu_w, sigma_w, noise, *, tr_max=_TR_MAX):
    """x_idx: int array (any shape), values in [0, 20).
       mu_w, sigma_w: [20, E] float32 embedding weights.
       noise: x_idx.shape + (E,) float32 standard-normal noise.
       Returns (z, kl): z.shape == x_idx.shape + (E,), kl scalar."""
    orig_shape = tuple(x_idx.shape)
    e = mu_w.shape[1]
    n = math.prod(orig_shape)

    # Hoist the O(20*E) table work (renorm / exp) out of the kernel.
    # TODO(synk): PyTorch Embedding(max_norm=1) also renorms the weight table
    # in place (a side effect on the parameters); only the forward output is
    # reproduced here.
    mu_t = _renorm_rows(mu_w.astype(jnp.float32))
    log_sigma_t = _renorm_rows(sigma_w.astype(jnp.float32))
    sigma_t = jnp.exp(log_sigma_t)

    # KL depends only on the action id: fold it into a 20-entry per-action
    # table and finish with a tiny gather + sum (exact f32; removes the
    # log_sigma third of the matmul and every per-element KL op from the kernel).
    kl_row = jnp.sum(sigma_t * sigma_t + mu_t * mu_t - log_sigma_t - 0.5, axis=-1)
    x_flat = x_idx.reshape(-1).astype(jnp.int32)
    kl = jnp.sum(kl_row[x_flat])

    # Lane packing: P logical rows of width E per 128-lane physical row when E
    # divides 128; otherwise pad each table section (and the output width) to a
    # multiple of 128 so all slices / stores stay lane-dense.
    if e < LANES and LANES % e == 0 and e >= 8:
        p, e_pad = LANES // e, e
    else:
        p, e_pad = 1, pl.cdiv(e, LANES) * LANES
    pe = p * e_pad

    mu_tab, sigma_tab = mu_t, sigma_t
    if e_pad != e:
        mu_tab = jnp.pad(mu_tab, ((0, 0), (0, e_pad - e)))
        sigma_tab = jnp.pad(sigma_tab, ((0, 0), (0, e_pad - e)))
    table = jnp.concatenate(
        [_block_diag(mu_tab, p), _block_diag(sigma_tab, p)],
        axis=1).astype(jnp.bfloat16)                       # [p*20, 2*pe]

    # Row packing: pad N only up to a multiple of P (<= P-1 rows; usually zero,
    # in which case the wrapper does pure reshapes and no extra HBM passes).
    r = pl.cdiv(n, p)                                      # packed rows
    n_round = r * p
    noise_rows = noise.reshape(n, e).astype(jnp.float32)
    if n_round != n:
        x_flat_in = jnp.pad(x_flat, (0, n_round - n))      # pad with valid id 0
        noise_rows = jnp.pad(noise_rows, ((0, n_round - n), (0, 0)))
    else:
        x_flat_in = x_flat
    if e_pad != e:
        noise_rows = jnp.pad(noise_rows, ((0, 0), (0, e_pad - e)))
    idx2d = x_flat_in.reshape(r, p)
    noise2d = noise_rows.reshape(r, pe)

    # Tiling: large blocks to amortize the ~0.35us/step overhead, capped so
    # per-block VMEM stays small and (when there is enough work) the grid keeps
    # >= 2 "parallel" steps for v7x's two TensorCores.  Ragged edge blocks are
    # masked by Pallas, so no padding of r is needed.
    if r <= 8:
        tr = r
        grid = 1
    else:
        tr_cap = max(64, ((tr_max * LANES) // pe) // 8 * 8)
        half = (((r + 1) // 2 + 7) // 8) * 8
        tr = min(tr_cap, half)
        grid = pl.cdiv(r, tr)

    kernel = functools.partial(_actions_ae_kernel, p=p, pe=pe)
    z2d = pl.pallas_call(
        kernel,
        grid=(grid,),
        in_specs=[
            pl.BlockSpec((tr, p), lambda i: (i, 0)),        # action ids
            pl.BlockSpec(table.shape, lambda i: (0, 0)),    # replicated table
            pl.BlockSpec((tr, pe), lambda i: (i, 0)),       # noise
        ],
        out_specs=pl.BlockSpec((tr, pe), lambda i: (i, 0)),  # z
        out_shape=jax.ShapeDtypeStruct((r, pe), jnp.float32),
        compiler_params=pltpu.CompilerParams(
            dimension_semantics=("parallel",),
            vmem_limit_bytes=32 * 1024 * 1024,
        ),
    )(idx2d, table, noise2d)

    z_rows = z2d.reshape(n_round, e_pad)
    if e_pad != e:
        z_rows = z_rows[:, :e]
    if n_round != n:
        z_rows = z_rows[:n]
    z = z_rows.reshape(*orig_shape, e)
    return z, kl


if __name__ == "__main__":
    key = jax.random.PRNGKey(0)
    k_idx, k_mu, k_sigma, k_noise = jax.random.split(key, 4)

    batch, seq, action_emb = 2, 8, 32

    # Deterministic "parameters" (nn.Embedding(20, action_emb) shapes).
    mu_w = jax.random.normal(k_mu, (NUM_ACTIONS, action_emb), jnp.float32)
    sigma_w = 0.1 * jax.random.normal(k_sigma, (NUM_ACTIONS, action_emb),
                                      jnp.float32)

    # Integer action ids and the standard-normal reparameterization noise.
    x = jax.random.randint(k_idx, (batch, seq), 0, NUM_ACTIONS, jnp.int32)
    noise = jax.random.normal(k_noise, (batch, seq, action_emb), jnp.float32)

    z, kl = actions_autoencoder_forward(x, mu_w, sigma_w, noise)
    jax.block_until_ready((z, kl))

    # Pure-JAX reference for the forward pass.
    mu_t = _renorm_rows(mu_w)
    ls_t = _renorm_rows(sigma_w)
    mu_ref = mu_t[x]
    sigma_ref = jnp.exp(ls_t)[x]
    z_ref = mu_ref + sigma_ref * noise
    kl_ref = jnp.sum(sigma_ref ** 2 + mu_ref ** 2 - ls_t[x] - 0.5)

    assert z.shape == (batch, seq, action_emb)
    assert kl.shape == ()
    assert bool(jnp.all(jnp.isfinite(z))) and bool(jnp.isfinite(kl))
    assert bool(jnp.allclose(z, z_ref, rtol=1e-2, atol=1e-2))
    assert bool(jnp.abs(kl - kl_ref) <= 1e-2 * jnp.abs(kl_ref) + 1e-1)
    print("KERNEL_OK")
</pallas_src>

<mosaic_0001>
module attributes {stable_mosaic.version = 11 : i64} {
  func.func @_actions_ae_kernel(%arg0: i32, %arg1: memref<4x4xi32, #tpu.memory_space<vmem>>, %arg2: memref<80x256xbf16, #tpu.memory_space<vmem>>, %arg3: memref<4x128xf32, #tpu.memory_space<vmem>>, %arg4: memref<4x128xf32, #tpu.memory_space<vmem>>) attributes {dimension_semantics = [#tpu.dimension_semantics<parallel>], iteration_bounds = array<i64: 1>, scalar_prefetch = 0 : i64, scratch_operands = 0 : i64, tpu.core_type = #tpu.core_type<tc>, window_params = [{transform_indices = @transform_0, window_bounds = array<i64: 4, 4>}, {pipeline_mode = #tpu.pipeline_mode<synchronous>, transform_indices = @transform_1, window_bounds = array<i64: 80, 256>}, {transform_indices = @transform_2, window_bounds = array<i64: 4, 128>}, {transform_indices = @transform_3, window_bounds = array<i64: 4, 128>}]} {
    %c0 = arith.constant 0 : index
    %c0_0 = arith.constant 0 : index
    %0 = vector.load %arg1[%c0, %c0_0] : memref<4x4xi32, #tpu.memory_space<vmem>>, vector<4x4xi32>
    %1 = tpu.iota {dimensions = array<i32: 1>} : vector<4x80xi32>
    %2 = vector.extract_strided_slice %0 {offsets = [0, 0], sizes = [4, 1], strides = [1, 1]} : vector<4x4xi32> to vector<4x1xi32>
    %3 = vector.broadcast %2 : vector<4x1xi32> to vector<4x80xi32>
    %4 = arith.cmpi eq, %1, %3 : vector<4x80xi32>
    %5 = vector.extract_strided_slice %0 {offsets = [0, 1], sizes = [4, 1], strides = [1, 1]} : vector<4x4xi32> to vector<4x1xi32>
    %c20_i32 = arith.constant 20 : i32
    %6 = vector.broadcast %c20_i32 : i32 to vector<4x1xi32>
    %7 = arith.addi %5, %6 : vector<4x1xi32>
    %8 = vector.broadcast %7 : vector<4x1xi32> to vector<4x80xi32>
    %9 = arith.cmpi eq, %1, %8 : vector<4x80xi32>
    %10 = arith.ori %4, %9 : vector<4x80xi1>
    %11 = vector.extract_strided_slice %0 {offsets = [0, 2], sizes = [4, 1], strides = [1, 1]} : vector<4x4xi32> to vector<4x1xi32>
    %c40_i32 = arith.constant 40 : i32
    %12 = vector.broadcast %c40_i32 : i32 to vector<4x1xi32>
    %13 = arith.addi %11, %12 : vector<4x1xi32>
    %14 = vector.broadcast %13 : vector<4x1xi32> to vector<4x80xi32>
    %15 = arith.cmpi eq, %1, %14 : vector<4x80xi32>
    %16 = arith.ori %10, %15 : vector<4x80xi1>
    %17 = vector.extract_strided_slice %0 {offsets = [0, 3], sizes = [4, 1], strides = [1, 1]} : vector<4x4xi32> to vector<4x1xi32>
    %c60_i32 = arith.constant 60 : i32
    %18 = vector.broadcast %c60_i32 : i32 to vector<4x1xi32>
    %19 = arith.addi %17, %18 : vector<4x1xi32>
    %20 = vector.broadcast %19 : vector<4x1xi32> to vector<4x80xi32>
    %21 = arith.cmpi eq, %1, %20 : vector<4x80xi32>
    %22 = arith.ori %16, %21 : vector<4x80xi1>
    %23 = arith.extui %22 : vector<4x80xi1> to vector<4x80xi32>
    %24 = arith.sitofp %23 : vector<4x80xi32> to vector<4x80xf32>
    %25 = arith.truncf %24 : vector<4x80xf32> to vector<4x80xbf16>
    %c0_1 = arith.constant 0 : index
    %c0_2 = arith.constant 0 : index
    %26 = vector.load %arg2[%c0_1, %c0_2] : memref<80x256xbf16, #tpu.memory_space<vmem>>, vector<80x256xbf16>
    %cst = arith.constant dense<0.000000e+00> : vector<4x256xf32>
    %27 = tpu.matmul %25, %26, %cst {dimension_numbers = #tpu.dot_dimension_numbers<[1], [0], [0], [1], [0, 0, 1, 1], [], []>} : vector<4x80xbf16>, vector<80x256xbf16>, vector<4x256xf32> -> vector<4x256xf32>
    %28 = vector.extract_strided_slice %27 {offsets = [0, 0], sizes = [4, 128], strides = [1, 1]} : vector<4x256xf32> to vector<4x128xf32>
    %29 = vector.extract_strided_slice %27 {offsets = [0, 128], sizes = [4, 128], strides = [1, 1]} : vector<4x256xf32> to vector<4x128xf32>
    %c0_3 = arith.constant 0 : index
    %c0_4 = arith.constant 0 : index
    %30 = vector.load %arg3[%c0_3, %c0_4] : memref<4x128xf32, #tpu.memory_space<vmem>>, vector<4x128xf32>
    %31 = arith.mulf %29, %30 : vector<4x128xf32>
    %32 = arith.addf %28, %31 : vector<4x128xf32>
    %c0_5 = arith.constant 0 : index
    %c0_6 = arith.constant 0 : index
    %33 = vector.load %arg4[%c0_5, %c0_6] : memref<4x128xf32, #tpu.memory_space<vmem>>, vector<4x128xf32>
    tpu.vector_store %arg4[%c0_5, %c0_6], %32 {strides = array<i32>} : memref<4x128xf32, #tpu.memory_space<vmem>>, vector<4x128xf32>,
    return
  }
  func.func @transform_0(%arg0: i32) -> (i32, i32) {
    %c0_i32 = arith.constant 0 : i32
    %c0_i32_0 = arith.constant 0 : i32
    return %arg0, %c0_i32 : i32, i32
  }
  func.func @transform_1(%arg0: i32) -> (i32, i32) {
    %c0_i32 = arith.constant 0 : i32
    %c0_i32_0 = arith.constant 0 : i32
    %c0_i32_1 = arith.constant 0 : i32
    return %c0_i32, %c0_i32_0 : i32, i32
  }
  func.func @transform_2(%arg0: i32) -> (i32, i32) {
    %c0_i32 = arith.constant 0 : i32
    %c0_i32_0 = arith.constant 0 : i32
    return %arg0, %c0_i32 : i32, i32
  }
  func.func @transform_3(%arg0: i32) -> (i32, i32) {
    %c0_i32 = arith.constant 0 : i32
    %c0_i32_0 = arith.constant 0 : i32
    return %arg0, %c0_i32 : i32, i32
  }
}

</mosaic_0001>

<llo_original>
// kernel: tpu_custom_call.1
$region0: #{tpu_custom_call.1}
  #allocation0 [shape = 'u32[]', space=smem, size = 0x4, offset = 0x4, fixed_abs, tag = 'smem constant byte address 0x4 - core index']
  #allocation1 [shape = 'u32[72,128]{1,0:T(1,128)}', space=vmem, size = 0x9000, scoped, tag = 'internal scratch']
  %s0 = inlined_call_operand.hbm [shape: s32[4,4], index: 0, kind: input, shape index: {}]
  %s1 = inlined_call_operand.hbm [shape: bf16[80,256], index: 1, kind: input, shape index: {}]
  %s2 = inlined_call_operand.hbm [shape: f32[4,128], index: 2, kind: input, shape index: {}]
  %s3 = inlined_call_operand.hbm [shape: f32[4,128], index: 3, kind: output, shape index: {}]
  %s4 = sld [smem:[#allocation0]]
  $region34: #{tpu_custom_call.1} parent=0
    _
  %s6 = ssub.s32 1, %s4
  %s7 = scalar_select 0, %s6, %s4
  $region1: #{tpu_custom_call.1} parent=0
    #allocation2 [shape = 'u8[2048]{0}', space=vmem, size = 0x800, scoped, tag = 'input window, operand 0, single buffered']
    #allocation3 [shape = 's32[1]{0}', space=sflag, size = 0x4, scoped, tag = 'scoped memory for tpu_custom_call.1']
    #allocation4 [shape = 's32[1]{0}', space=sflag, size = 0x4, scoped, tag = 'scoped memory for tpu_custom_call.1']
    #allocation5 [shape = 'u8[40960]{0}', space=vmem, size = 0xa000, scoped, tag = 'input window, operand 1, single buffered']
    #allocation6 [shape = 's32[1]{0}', space=sflag, size = 0x4, scoped, tag = 'scoped memory for tpu_custom_call.1']
    #allocation7 [shape = 'u8[2048]{0}', space=vmem, size = 0x800, scoped, tag = 'input window, operand 2, single buffered']
    #allocation8 [shape = 'u8[2048]{0}', space=vmem, size = 0x800, scoped, tag = 'output window, operand 0, single buffered']
    %8 = vsyncpa [#allocation3], 0
    %9 = vsyncpa [#allocation6], 0
    %10 = vsyncpa [#allocation4], 0
    // Predicated region
    $region2: #{tpu_custom_call.1} parent=1 // pred_check
      _
    $region3: #{tpu_custom_call.1} parent=1 // pred_check_branch
      %12 = sbr.rel (0) target = $region5
    $region4: #{tpu_custom_call.1} parent=1 // pred_region
      %14 = vsyncadd [#allocation3], 0
      %s16 = sshll.u32 %s0, 4
      %s17 = int_to_ptr.hbm [resolvable:$true] %s16
      %s18 = sshll.u32 [#allocation2], 4
      %s19 = int_to_ptr.vmem [resolvable:$true] %s18
      %21 = dma.hbm_to_vmem [thread:$0]  %s17, 64, %s19, [#allocation3]
    $region5: #{tpu_custom_call.1} parent=1 // pred_fallthru
      _
    // Predicated region
    $region6: #{tpu_custom_call.1} parent=1 // pred_check
      _
    $region7: #{tpu_custom_call.1} parent=1 // pred_check_branch
      %23 = sbr.rel (0) target = $region9
    $region8: #{tpu_custom_call.1} parent=1 // pred_region
      %25 = vsyncadd [#allocation6], 0
      %s26 = sshll.u32 %s1, 4
      %s27 = int_to_ptr.hbm [resolvable:$true] %s26
      %s28 = sshll.u32 [#allocation5], 4
      %s29 = int_to_ptr.vmem [resolvable:$true] %s28
      %34 = dma.hbm_to_vmem [thread:$0]  %s27, 1280, %s29, [#allocation6], 128, 128, 8
    $region9: #{tpu_custom_call.1} parent=1 // pred_fallthru
      _
    // Predicated region
    $region10: #{tpu_custom_call.1} parent=1 // pred_check
      _
    $region11: #{tpu_custom_call.1} parent=1 // pred_check_branch
      %36 = sbr.rel (0) target = $region13
    $region12: #{tpu_custom_call.1} parent=1 // pred_region
      %38 = vsyncadd [#allocation6], 0
      %s40 = sshll.u32 %s2, 4
      %s41 = int_to_ptr.hbm [resolvable:$true] %s40
      %s42 = sshll.u32 [#allocation7], 4
      %s43 = int_to_ptr.vmem [resolvable:$true] %s42
      %45 = dma.hbm_to_vmem [thread:$0]  %s41, 64, %s43, [#allocation6]
    $region13: #{tpu_custom_call.1} parent=1 // pred_fallthru
      _
    // Predicated region
    $region14: #{tpu_custom_call.1} parent=1 // pred_check
      _
    $region15: #{tpu_custom_call.1} parent=1 // pred_check_branch
      %47 = sbr.rel (0) target = $region17
    $region16: #{tpu_custom_call.1} parent=1 // pred_region
      %49 = dma.done [#allocation3], 64
    $region17: #{tpu_custom_call.1} parent=1 // pred_fallthru
      _
    // Predicated region
    $region18: #{tpu_custom_call.1} parent=1 // pred_check
      _
    $region19: #{tpu_custom_call.1} parent=1 // pred_check_branch
      %51 = sbr.rel (0) target = $region21
    $region20: #{tpu_custom_call.1} parent=1 // pred_region
      %53 = dma.done [#allocation6], 1280
    $region21: #{tpu_custom_call.1} parent=1 // pred_fallthru
      _
    // Predicated region
    $region22: #{tpu_custom_call.1} parent=1 // pred_check
      _
    $region23: #{tpu_custom_call.1} parent=1 // pred_check_branch
      %55 = sbr.rel (0) target = $region25
    $region24: #{tpu_custom_call.1} parent=1 // pred_region
      %57 = dma.done [#allocation6], 64
    $region25: #{tpu_custom_call.1} parent=1 // pred_fallthru
      _
    %v59 = vld [vmem:[#allocation2] sm:$0xf]
    %v60 = vlaneseq
    %v61 = vand.u32 %v60, 127
    %62 = vset.pattern.permute.xlu0 0
    %63 = vperm.xlu0 %62, %v59
    %v64 = vpop.permute.xlu0 %63
    %vm65 = vcmp.eq.s32.totalorder %v61, %v64
    %v66 = vadd.s32 %v59, 20
    %67 = vset.pattern.permute.xlu0 1
    %68 = vperm.xlu0 %67, %v66
    %v69 = vpop.permute.xlu0 %68
    %vm70 = vcmp.eq.s32.totalorder %v61, %v69
    %vm71 = vmor %vm65, %vm70
    %v72 = vadd.s32 %v59, 40
    %73 = vset.pattern.permute.xlu0 2
    %74 = vperm.xlu0 %73, %v72
    %v75 = vpop.permute.xlu0 %74
    %vm76 = vcmp.eq.s32.totalorder %v61, %v75
    %vm77 = vmor %vm71, %vm76
    %v78 = vadd.s32 %v59, 60
    %79 = vset.pattern.permute.xlu0 3
    %80 = vperm.xlu0 %79, %v78
    %v81 = vpop.permute.xlu0 %80
    %vm82 = vcmp.eq.s32.totalorder %v61, %v81
    %vm83 = vmor %vm77, %vm82
    %v84 = vsel %vm83, 1, 0
    %v85 = vcvt.s32.f32 %v84
    %v86 = vpack.c.bf16 %v85, %v85
    %v87 = vld [vmem:[#allocation5] sm:$0xff]
    %v88 = vld [vmem:[#allocation5 + $0x8] sm:$0xff]
    %v89 = vld [vmem:[#allocation5 + $0x10] sm:$0xff]
    %v90 = vld [vmem:[#allocation5 + $0x18] sm:$0xff]
    %v91 = vld [vmem:[#allocation5 + $0x20] sm:$0xff]
    %v92 = vld [vmem:[#allocation5 + $0x28] sm:$0xff]
    %v93 = vld [vmem:[#allocation5 + $0x30] sm:$0xff]
    %v94 = vld [vmem:[#allocation5 + $0x38] sm:$0xff]
    %v95 = vld [vmem:[#allocation5 + $0x40] sm:$0xff]
    %v96 = vld [vmem:[#allocation5 + $0x48] sm:$0xff]
    %v107 = vunpack.c.l.b16 %v87
    %v108 = vunpack.c.h.b16 %v87
    %v109 = vunpack.c.l.b16 %v88
    %v110 = vunpack.c.h.b16 %v88
    %v111 = vunpack.c.l.b16 %v89
    %v112 = vunpack.c.h.b16 %v89
    %v113 = vunpack.c.l.b16 %v90
    %v114 = vunpack.c.h.b16 %v90
    %v115 = vunpack.c.l.b16 %v91
    %v116 = vunpack.c.h.b16 %v91
    %v117 = vunpack.c.l.b16 %v92
    %v118 = vunpack.c.h.b16 %v92
    %v119 = vunpack.c.l.b16 %v93
    %v120 = vunpack.c.h.b16 %v93
    %v121 = vunpack.c.l.b16 %v94
    %v122 = vunpack.c.h.b16 %v94
    %v123 = vunpack.c.l.b16 %v95
    %v124 = vunpack.c.h.b16 %v95
    %v125 = vunpack.c.l.b16 %v96
    %v126 = vunpack.c.h.b16 %v96
    %v127 = vpack.c.b16 %v109, %v107
    %v128 = vpack.c.b16 %v110, %v108
    %v129 = vpack.c.b16 %v113, %v111
    %v130 = vpack.c.b16 %v114, %v112
    %v131 = vpack.c.b16 %v117, %v115
    %v132 = vpack.c.b16 %v118, %v116
    %v133 = vpack.c.b16 %v121, %v119
    %v134 = vpack.c.b16 %v122, %v120
    %v135 = vpack.c.b16 %v125, %v123
    %v136 = vpack.c.b16 %v126, %v124
    %vm147 = vcmask 654336
    %v149 = vsel %vm147, %v86, 0
    %151 = vmatpush.bf16.msra.mxu0 0
    %152 = vmatpush.bf16.msra.mxu0 0
    %153 = vmatpush.bf16.msra.mxu0 0
    %154 = vmatpush.bf16.msra.mxu0 %v135
    %155 = vmatpush.bf16.msra.mxu0 %v133
    %156 = vmatpush.bf16.msra.mxu0 %v131
    %157 = vmatpush.bf16.msra.mxu0 %v129
    %158 = vmatpush.bf16.msra.mxu0 %v127
    %159 = vmatmul.bf16.gmra.mxu0 %v149
    %v160 = vpop.f32.mrf.mxu0
    %v161 = vadd.f32 0.0, %v160
    %v162 = vpop.f32.mrf.mxu0
    %163 = vdwg.mxu0
    %164 = vmatpush.bf16.msra.mxu0 0
    %165 = vmatpush.bf16.msra.mxu0 0
    %166 = vmatpush.bf16.msra.mxu0 0
    %167 = vmatpush.bf16.msra.mxu0 %v136
    %168 = vmatpush.bf16.msra.mxu0 %v134
    %169 = vmatpush.bf16.msra.mxu0 %v132
    %170 = vmatpush.bf16.msra.mxu0 %v130
    %171 = vmatpush.bf16.msra.mxu0 %v128
    %172 = vmatmul.bf16.gmra.mxu0 %v149
    %v173 = vpop.f32.mrf.mxu0
    %v174 = vadd.f32 0.0, %v173
    %v175 = vpop.f32.mrf.mxu0
    %176 = vdwg.mxu0
    %v177 = vld [vmem:[#allocation7] sm:$0xf]
    %v178 = vmul.f32 %v174, %v177
    %v179 = vadd.f32 %v161, %v178
    %180 = vst [vmem:[#allocation8] sm:$0xf] %v179
    // Predicated region
    $region26: #{tpu_custom_call.1} parent=1 // pred_check
      _
    $region27: #{tpu_custom_call.1} parent=1 // pred_check_branch
      %182 = sbr.rel (0) target = $region29
    $region28: #{tpu_custom_call.1} parent=1 // pred_region
      %184 = vsyncadd [#allocation4], 0
      %s186 = sshll.u32 [#allocation8], 4
      %s187 = int_to_ptr.vmem [resolvable:$true] %s186
      %s188 = sshll.u32 %s3, 4
      %s189 = int_to_ptr.hbm [resolvable:$true] %s188
      %191 = dma.vmem_to_hbm [thread:$0]  %s187, 64, %s189, [#allocation4]
    $region29: #{tpu_custom_call.1} parent=1 // pred_fallthru
      _
    // Predicated region
    $region30: #{tpu_custom_call.1} parent=1 // pred_check
      _
    $region31: #{tpu_custom_call.1} parent=1 // pred_check_branch
      %193 = sbr.rel (0) target = $region33
    $region32: #{tpu_custom_call.1} parent=1 // pred_region
      %195 = dma.done [#allocation4], 64
    $region33: #{tpu_custom_call.1} parent=1 // pred_fallthru
      _
    %196 = vsyncpa [#allocation3], 1
    %197 = vsyncpa [#allocation6], 1
    %198 = vsyncpa [#allocation4], 1

</llo_original>
